<compile_context>
chip_gen: v7x
topology: tpu7x:2x2x1
jax: 0.10.0
libtpu: 0.0.40
codegen_flags: <defaults>
</compile_context>

<pallas_src>
import jax
import jax.numpy as jnp
from jax.experimental import pallas as pl
from jax.experimental.pallas import tpu as pltpu

_LANES = 128           # vreg lane width; last dim of every tile
_MAX_TILE_ROWS = 4096  # 4096 x 128 f32 = 2 MiB per block; in+out double-
                       # buffered -> 8 MiB VMEM, under every chip's default
                       # scoped-VMEM limit (16 MiB v5e / 32 MiB v6e, v7x).


def _linear_kernel(w_ref, b_ref, x_ref, o_ref):
    # w_ref, b_ref: (1,) scalars in SMEM.
    # x_ref, o_ref: (tile_rows, 128) tiles in VMEM.
    # y = x * W[0,0] + b[0]  (exactly x @ W^T + b for a 1x1 Linear).
    o_ref[...] = x_ref[...] * w_ref[0] + b_ref[0]


def _choose_tile_rows(rows: int) -> int:
    """Rows per grid step.

    Multiple of 8 sublanes, capped at _MAX_TILE_ROWS, and — once there is
    more than one sublane group of data — at least 2 grid steps so v7x's two
    TensorCores / DMA paths both get work.
    """
    if rows <= 8:
        # Single block equal to the full leading dim (always a legal block).
        return rows
    half = -(-rows // 2)               # cdiv(rows, 2): aim for >= 2 steps
    tile = ((half + 7) // 8) * 8       # round up to a sublane multiple
    return min(_MAX_TILE_ROWS, tile)


def linear_forward(x, weight, bias):
    """x: (N, 1) f32, weight: (1, 1) f32, bias: (1,) f32 -> (N, 1) f32."""
    n = x.shape[0]
    dtype = x.dtype

    # Lane-dense repack. x is contiguous, so when N is a multiple of 128 the
    # (rows, 128) reshape (and the inverse on the output) is a free bitcast —
    # no extra HBM passes.  Only a ragged tail (< 128 elements) pays a pad on
    # the input and a slice on the output.
    # TODO(synk): for the ragged case, fuse the pad into the input DMA via
    # CompilerParams(allow_input_fusion=...) to drop that extra pass too.
    x_flat = x.reshape(-1)
    pad = (-n) % _LANES
    if pad:
        x_flat = jnp.pad(x_flat, (0, pad))
    rows = (n + pad) // _LANES
    x_slab = x_flat.reshape(rows, _LANES)

    tile_rows = _choose_tile_rows(rows)
    grid = (pl.cdiv(rows, tile_rows),)  # partial final block is masked by Pallas

    # Params go to SMEM as scalars.  Cast to x.dtype: for the f32 module this
    # is exact; if reused with low-precision activations the compute runs in
    # that lower precision (acceptable for a scale+bias).
    w_s = weight.reshape(1).astype(dtype)
    b_s = bias.reshape(1).astype(dtype)

    out_slab = pl.pallas_call(
        _linear_kernel,
        out_shape=jax.ShapeDtypeStruct((rows, _LANES), dtype),
        grid=grid,
        in_specs=[
            pl.BlockSpec(memory_space=pltpu.MemorySpace.SMEM),    # weight scalar
            pl.BlockSpec(memory_space=pltpu.MemorySpace.SMEM),    # bias scalar
            pl.BlockSpec((tile_rows, _LANES), lambda i: (i, 0)),  # x tile
        ],
        out_specs=pl.BlockSpec((tile_rows, _LANES), lambda i: (i, 0)),
        compiler_params=pltpu.CompilerParams(
            # Independent row-tiles: lets v7x shard the grid across its 2 TCs;
            # harmless on single-TC v5e/v6e.
            dimension_semantics=("parallel",),
        ),
        # Tell XLA's scheduler this is a cheap, purely mem-bound op so it
        # overlaps well when embedded in a larger jit.
        cost_estimate=pl.CostEstimate(
            flops=2 * rows * _LANES,
            bytes_accessed=2 * rows * _LANES * jnp.dtype(dtype).itemsize,
            transcendentals=0,
        ),
    )(w_s, b_s, x_slab)

    # Undo the lane-dense packing (free view when N % 128 == 0).
    out_flat = out_slab.reshape(-1)
    if pad:
        out_flat = out_flat[:n]
    return out_flat.reshape(n, 1)


if __name__ == "__main__":
    key = jax.random.PRNGKey(0)
    k_x, k_w, k_b, k_x2, k_x3 = jax.random.split(key, 5)

    # PyTorch Linear(1,1) init is U(-1/sqrt(in), 1/sqrt(in)) with in=1.
    weight = jax.random.uniform(k_w, (1, 1), jnp.float32, minval=-1.0, maxval=1.0)
    bias = jax.random.uniform(k_b, (1,), jnp.float32, minval=-1.0, maxval=1.0)

    # Small primary case (matches the module's expected (N, 1) input).
    batch = 8
    x = jax.random.normal(k_x, (batch, 1), jnp.float32)
    y = jax.block_until_ready(linear_forward(x, weight, bias))
    y_ref = x @ weight.T + bias
    assert y.shape == (batch, 1)
    assert jnp.allclose(y, y_ref, atol=1e-6), "mismatch vs reference (batch=8)"

    # Ragged case (N not a multiple of 128): exercises the pad/slice path.
    batch2 = 300
    x2 = jax.random.normal(k_x2, (batch2, 1), jnp.float32)
    y2 = jax.block_until_ready(linear_forward(x2, weight, bias))
    y2_ref = x2 @ weight.T + bias
    assert y2.shape == (batch2, 1)
    assert jnp.allclose(y2, y2_ref, atol=1e-6), "mismatch vs reference (batch=300)"

    # Fast path (N % 128 == 0) with a multi-step grid and a partial final
    # block in the row dimension (rows=20, tile_rows=16, grid=2).
    batch3 = 128 * 20
    x3 = jax.random.normal(k_x3, (batch3, 1), jnp.float32)
    y3 = jax.block_until_ready(linear_forward(x3, weight, bias))
    y3_ref = x3 @ weight.T + bias
    assert y3.shape == (batch3, 1)
    assert jnp.allclose(y3, y3_ref, atol=1e-6), "mismatch vs reference (batch=2560)"

    print("KERNEL_OK")
</pallas_src>

<mosaic_0001>
module attributes {stable_mosaic.version = 11 : i64} {
  func.func @_linear_kernel(%arg0: i32, %arg1: memref<1xf32, #tpu.memory_space<smem>>, %arg2: memref<1xf32, #tpu.memory_space<smem>>, %arg3: memref<1x128xf32, #tpu.memory_space<vmem>>, %arg4: memref<1x128xf32, #tpu.memory_space<vmem>>) attributes {dimension_semantics = [#tpu.dimension_semantics<parallel>], iteration_bounds = array<i64: 1>, scalar_prefetch = 0 : i64, scratch_operands = 0 : i64, tpu.core_type = #tpu.core_type<tc>, window_params = [{transform_indices = @transform_0, window_bounds = array<i64: 1>}, {transform_indices = @transform_1, window_bounds = array<i64: 1>}, {transform_indices = @transform_2, window_bounds = array<i64: 1, 128>}, {transform_indices = @transform_3, window_bounds = array<i64: 1, 128>}]} {
    %c0 = arith.constant 0 : index
    %c0_0 = arith.constant 0 : index
    %0 = vector.load %arg3[%c0, %c0_0] : memref<1x128xf32, #tpu.memory_space<vmem>>, vector<1x128xf32>
    %c0_1 = arith.constant 0 : index
    %1 = memref.load %arg1[%c0_1] : memref<1xf32, #tpu.memory_space<smem>>
    %2 = vector.broadcast %1 : f32 to vector<1x128xf32>
    %3 = arith.mulf %0, %2 : vector<1x128xf32>
    %c0_2 = arith.constant 0 : index
    %4 = memref.load %arg2[%c0_2] : memref<1xf32, #tpu.memory_space<smem>>
    %5 = vector.broadcast %4 : f32 to vector<1x128xf32>
    %6 = arith.addf %3, %5 : vector<1x128xf32>
    %c0_3 = arith.constant 0 : index
    %c0_4 = arith.constant 0 : index
    %7 = vector.load %arg4[%c0_3, %c0_4] : memref<1x128xf32, #tpu.memory_space<vmem>>, vector<1x128xf32>
    tpu.vector_store %arg4[%c0_3, %c0_4], %6 {strides = array<i32>} : memref<1x128xf32, #tpu.memory_space<vmem>>, vector<1x128xf32>,
    return
  }
  func.func @transform_0(%arg0: i32) -> i32 {
    %c0_i32 = arith.constant 0 : i32
    %c0_i32_0 = arith.constant 0 : i32
    return %c0_i32 : i32
  }
  func.func @transform_1(%arg0: i32) -> i32 {
    %c0_i32 = arith.constant 0 : i32
    %c0_i32_0 = arith.constant 0 : i32
    return %c0_i32 : i32
  }
  func.func @transform_2(%arg0: i32) -> (i32, i32) {
    %c0_i32 = arith.constant 0 : i32
    %c0_i32_0 = arith.constant 0 : i32
    return %arg0, %c0_i32 : i32, i32
  }
  func.func @transform_3(%arg0: i32) -> (i32, i32) {
    %c0_i32 = arith.constant 0 : i32
    %c0_i32_0 = arith.constant 0 : i32
    return %arg0, %c0_i32 : i32, i32
  }
}

</mosaic_0001>

<llo_original>
// kernel: tpu_custom_call.1
$region0: #{tpu_custom_call.1}
  #allocation0 [shape = 'u32[]', space=smem, size = 0x4, offset = 0x4, fixed_abs, tag = 'smem constant byte address 0x4 - core index']
  #allocation1 [shape = 'u32[144,128]{1,0:T(1,128)}', space=vmem, size = 0x12000, scoped, tag = 'internal scratch']
  #allocation2 [shape = 'f32[1]{0:T(128)S(6)}', space=smem, size = 0x200, scoped, tag = 'scoped memory for tpu_custom_call.1']
  #allocation3 [shape = 'f32[1]{0:T(128)S(6)}', space=smem, size = 0x200, scoped, tag = 'scoped memory for tpu_custom_call.1']
  %s0 = inlined_call_operand.<no memory space> [shape: f32[1], index: 0, kind: input, shape index: {}]
  %s1 = inlined_call_operand.<no memory space> [shape: f32[1], index: 1, kind: input, shape index: {}]
  %s2 = inlined_call_operand.vmem [shape: f32[1,128], index: 2, kind: input, shape index: {}]
  %s3 = inlined_call_operand.hbm [shape: f32[1,128], index: 3, kind: output, shape index: {}]
  %s4 = sld [smem:[#allocation0]]
  $region22: #{tpu_custom_call.1} parent=0
    _
  %s6 = ssub.s32 1, %s4
  %s7 = scalar_select 0, %s6, %s4
  %8 = sst [smem:[#allocation2]] %s0
  %9 = sst [smem:[#allocation3]] %s1
  $region1: #{tpu_custom_call.1} parent=0
    #allocation4 [shape = 'u8[512]{0}', space=vmem, size = 0x400, scoped, tag = 'output window, operand 0, single buffered']
    #allocation5 [shape = 's32[1]{0}', space=sflag, size = 0x4, scoped, tag = 'scoped memory for tpu_custom_call.1']
    %10 = vsyncpa [#allocation5], 0
    // Predicated region
    $region2: #{tpu_custom_call.1} parent=1 // pred_check
      _
    $region3: #{tpu_custom_call.1} parent=1 // pred_check_branch
      %12 = sbr.rel (0) target = $region5
    $region4: #{tpu_custom_call.1} parent=1 // pred_region
      _
    $region5: #{tpu_custom_call.1} parent=1 // pred_fallthru
      _
    // Predicated region
    $region6: #{tpu_custom_call.1} parent=1 // pred_check
      _
    $region7: #{tpu_custom_call.1} parent=1 // pred_check_branch
      %14 = sbr.rel (0) target = $region9
    $region8: #{tpu_custom_call.1} parent=1 // pred_region
      _
    $region9: #{tpu_custom_call.1} parent=1 // pred_fallthru
      _
    // Predicated region
    $region10: #{tpu_custom_call.1} parent=1 // pred_check
      _
    $region11: #{tpu_custom_call.1} parent=1 // pred_check_branch
      %16 = sbr.rel (0) target = $region13
    $region12: #{tpu_custom_call.1} parent=1 // pred_region
      _
    $region13: #{tpu_custom_call.1} parent=1 // pred_fallthru
      _
    %v17 = vld [vmem:[%s2] sm:$0x1]
    %s18 = sld [smem:[#allocation2]]
    %v19 = vstv %s18
    %v20 = vmul.f32 %v17, %v19
    %s21 = sld [smem:[#allocation3]]
    %v22 = vstv %s21
    %v23 = vadd.f32 %v20, %v22
    %24 = vst [vmem:[#allocation4] sm:$0x1] %v23
    // Predicated region
    $region14: #{tpu_custom_call.1} parent=1 // pred_check
      _
    $region15: #{tpu_custom_call.1} parent=1 // pred_check_branch
      %26 = sbr.rel (0) target = $region17
    $region16: #{tpu_custom_call.1} parent=1 // pred_region
      %s28 = ssub.s32 16, 16
      %29 = vsyncadd [#allocation5], %s28
      %s31 = sshll.u32 [#allocation4], 4
      %s32 = int_to_ptr.vmem [resolvable:$true] %s31
      %34 = dma.vmem_to_hbm [thread:$0]  %s32, 16, %s3, [#allocation5]
    $region17: #{tpu_custom_call.1} parent=1 // pred_fallthru
      _
    // Predicated region
    $region18: #{tpu_custom_call.1} parent=1 // pred_check
      _
    $region19: #{tpu_custom_call.1} parent=1 // pred_check_branch
      %36 = sbr.rel (0) target = $region21
    $region20: #{tpu_custom_call.1} parent=1 // pred_region
      %37 = dma.done [#allocation5], 16
    $region21: #{tpu_custom_call.1} parent=1 // pred_fallthru
      _
    %38 = vsyncpa [#allocation5], 1

</llo_original>
